<compile_context>
chip_gen: v7x
topology: tpu7x:2x2x1
jax: 0.10.0
libtpu: 0.0.40
codegen_flags: <defaults>
</compile_context>

<pallas_src>
import math

import jax
import jax.numpy as jnp
from jax.experimental import pallas as pl
from jax.experimental.pallas import tpu as pltpu


# ----------------------------- Pallas kernel --------------------------------
def _edca_kernel(scale_ref, feat_ref, out_ref):
    # Pure streaming FMA-free multiply: residual is already folded into the scale
    # (scale = factor*combined + 1), so each vreg costs a single vmul.
    out_ref[...] = feat_ref[...] * scale_ref[...]


# --------------------------- tiling helpers ----------------------------------
def _pick_lanes(step, C):
    """Largest lane width that is a multiple of both C (scale period) and 128 (full vst)."""
    total = step * C
    if total % 128 != 0:
        return C                                   # fallback: masked stores, still correct
    base = (C * 128) // math.gcd(C, 128)           # lcm(C, 128)
    if base > 2048 or total % base != 0:
        return C
    lanes = base
    # widen a bit (shaves sublane addressing overhead) while keeping rows >= 8
    while lanes * 2 <= 512 and total % (lanes * 2) == 0 and total // (lanes * 2) >= 8:
        lanes *= 2
    return lanes


def _pick_row_tile(rows, lanes, itemsize, max_tile_bytes=4 << 20):
    """Row tile bounded by a per-block VMEM byte budget ((in+out) x 2 buffers <= ~16 MiB)."""
    budget_rows = max(1, max_tile_bytes // (lanes * itemsize))
    if rows <= budget_rows:
        return rows                                # whole per-batch slab = one (full-dim) block
    g = 16 if itemsize == 2 else 8                 # native sublane tile (bf16: (16,128))
    # prefer an exact divisor (no ragged last block)
    for t in (8192, 4096, 2048, 1024, 512, 256, 128, 64, 32, 16, 8):
        if t <= budget_rows and t % g == 0 and rows % t == 0:
            return t
    # otherwise: largest g-multiple within budget; grid uses pl.cdiv (masked last block)
    return max((budget_rows // g) * g, g)


# --------------------- per-batch scale (tiny, done in JAX) --------------------
def _compute_scale(preference, params):
    """(batch, C) array of  factor * combined_softmax_weights + 1  (residual folded in)."""
    w1a, b1a, w2a, b2a = params["w1a"], params["b1a"], params["w2a"], params["b2a"]
    w1b, b1b, w2b, b2b = params["w1b"], params["b1b"], params["w2b"], params["b2b"]
    num_heads, head_dim, _ = w2a.shape
    batch = preference.shape[0]

    p1 = preference[:, 0].astype(jnp.float32)[:, None, None]           # (batch,1,1)
    p2 = preference[:, 1].astype(jnp.float32)[:, None, None]
    # TODO(synk): Dropout(0.5) after tanh is omitted -> eval-mode (identity) semantics.
    h1 = jnp.tanh(p1 * w1a[None] + b1a[None])                          # (batch,H,hd2)
    l1 = jnp.einsum('bhk,hdk->bhd', h1, w2a) + b2a[None]               # (batch,H,hd)
    s1 = jax.nn.softmax(l1, axis=-1)
    h2 = jnp.tanh(p2 * w1b[None] + b1b[None])
    l2 = jnp.einsum('bhk,hdk->bhd', h2, w2b) + b2b[None]
    s2 = jax.nn.softmax(l2, axis=-1)
    combined = 0.5 * (s1 + s2)                                         # (batch,H,hd)

    # factor = 800 - rougeWeights*400, rougeWeights = preference[0][1] (as in the module).
    # NOTE: this cross-batch read of batch 0 matches the PyTorch module but breaks if the
    # batch dimension is ever sharded across devices.
    factor = 800.0 - preference[0, 1].astype(jnp.float32) * 400.0
    return factor * combined.reshape(batch, num_heads * head_dim) + 1.0  # (batch, C)


# ------------------------------- wrapper -------------------------------------
def enhanced_dynamic_channel_attention(features, preference, params):
    batch, step, C = features.shape
    itemsize = jnp.dtype(features.dtype).itemsize

    lanes = _pick_lanes(step, C)
    lane_repeat = lanes // C
    rows = (step * C) // lanes
    row_tile = _pick_row_tile(rows, lanes, itemsize)
    row_blocks = pl.cdiv(rows, row_tile)

    # Lane-dense view of each batch's (step, C) slab; dtype preserved (f32 or bf16).
    feat_p = features.reshape(batch, rows, lanes)

    # Per-batch scale, tiled across the lane width, cast to the storage dtype so the
    # hot-loop multiply runs in bf16 on v6e/v7x (Mosaic upcasts on v5e automatically).
    scale = _compute_scale(preference, params)                          # (batch, C) f32
    scale_pat = jnp.tile(scale, (1, lane_repeat)).astype(features.dtype)[:, None, :]

    tile_bytes = row_tile * lanes * itemsize
    vmem_limit = int(min(max(32 << 20, 4 * tile_bytes + (2 << 20)), 64 << 20))

    out_p = pl.pallas_call(
        _edca_kernel,
        out_shape=jax.ShapeDtypeStruct((batch, rows, lanes), features.dtype),
        grid_spec=pl.GridSpec(
            grid=(batch, row_blocks),
            in_specs=[
                pl.BlockSpec((None, 1, lanes), lambda b, r: (b, 0, 0)),         # scale (tiny)
                pl.BlockSpec((None, row_tile, lanes), lambda b, r: (b, r, 0)),  # features
            ],
            out_specs=pl.BlockSpec((None, row_tile, lanes), lambda b, r: (b, r, 0)),
        ),
        compiler_params=pltpu.CompilerParams(
            dimension_semantics=("parallel", "parallel"),   # no carried state -> both axes parallel
            vmem_limit_bytes=vmem_limit),
    )(scale_pat, feat_p)
    return out_p.reshape(batch, step, C)


# --------------------------- deterministic params ----------------------------
def init_params(key, num_heads, head_dim):
    hd2 = head_dim // 2
    keys = jax.random.split(key, 8)

    def u(k, shape, fan_in):
        bound = 1.0 / (fan_in ** 0.5)
        return jax.random.uniform(k, shape, jnp.float32, -bound, bound)

    # PyTorch per-head parameter layouts:
    #   Linear(1, hd2):  weight (hd2, 1) -> stored flat (hd2,), bias (hd2,)
    #   Linear(hd2, hd): weight (hd, hd2), bias (hd,)
    return dict(
        w1a=u(keys[0], (num_heads, hd2), 1.0),
        b1a=u(keys[1], (num_heads, hd2), 1.0),
        w2a=u(keys[2], (num_heads, head_dim, hd2), hd2),
        b2a=u(keys[3], (num_heads, head_dim), hd2),
        w1b=u(keys[4], (num_heads, hd2), 1.0),
        b1b=u(keys[5], (num_heads, hd2), 1.0),
        w2b=u(keys[6], (num_heads, head_dim, hd2), hd2),
        b2b=u(keys[7], (num_heads, head_dim), hd2),
    )


# ----------------------------- pure-JAX reference ----------------------------
def reference(features, preference, params, num_heads, head_dim):
    batch, step, C = features.shape
    n = batch * step
    exp_pref = jnp.broadcast_to(preference[:, None, :],
                                (batch, step, preference.shape[1]))
    rouge = preference[0, 1]
    outs = []
    for i in range(num_heads):
        p1 = exp_pref[:, :, 0:1].reshape(n, 1)
        h1 = jnp.tanh(p1 * params["w1a"][i][None, :] + params["b1a"][i][None, :])
        l1 = h1 @ params["w2a"][i].T + params["b2a"][i][None, :]
        w1 = jax.nn.softmax(l1, axis=1).reshape(batch, step, head_dim)

        p2 = exp_pref[:, :, 1:2].reshape(n, 1)
        h2 = jnp.tanh(p2 * params["w1b"][i][None, :] + params["b1b"][i][None, :])
        l2 = h2 @ params["w2b"][i].T + params["b2b"][i][None, :]
        w2 = jax.nn.softmax(l2, axis=1).reshape(batch, step, head_dim)

        comb = (w1 + w2) / 2.0
        fs = features[:, :, i * head_dim:(i + 1) * head_dim]
        outs.append(fs * comb)
    wf = jnp.concatenate(outs, axis=-1)
    factor = 800.0 - rouge * 400.0
    return factor * wf + features


# --------------------------------- main ---------------------------------------
if __name__ == "__main__":
    batch, step = 2, 8
    preference_dim, feature_channels = 4, 32      # head_dim = 8
    num_heads = preference_dim
    head_dim = feature_channels // num_heads

    key = jax.random.PRNGKey(0)
    k_feat, k_pref, k_par = jax.random.split(key, 3)
    features = jax.random.normal(k_feat, (batch, step, feature_channels), jnp.float32)
    preference = jax.random.uniform(k_pref, (batch, preference_dim), jnp.float32)
    params = init_params(k_par, num_heads, head_dim)

    # ---- f32 path (matches the PyTorch module's dtype) ----
    out = jax.block_until_ready(
        enhanced_dynamic_channel_attention(features, preference, params))
    ref = reference(features, preference, params, num_heads, head_dim)
    assert out.shape == (batch, step, feature_channels)
    assert jnp.allclose(out, ref, rtol=1e-4, atol=1e-3), \
        f"f32 max abs err {float(jnp.max(jnp.abs(out - ref)))}"

    # ---- bf16 storage path (halved HBM traffic; multiply in bf16 on v6e/v7x) ----
    feat_bf16 = features.astype(jnp.bfloat16)
    out_bf16 = jax.block_until_ready(
        enhanced_dynamic_channel_attention(feat_bf16, preference, params))
    assert out_bf16.dtype == jnp.bfloat16
    ref_bf16 = reference(feat_bf16.astype(jnp.float32), preference, params,
                         num_heads, head_dim)
    assert jnp.allclose(out_bf16.astype(jnp.float32), ref_bf16, rtol=3e-2, atol=3e-1), \
        f"bf16 max abs err {float(jnp.max(jnp.abs(out_bf16.astype(jnp.float32) - ref_bf16)))}"

    print("KERNEL_OK")
</pallas_src>

<mosaic_0001>
module attributes {stable_mosaic.version = 11 : i64} {
  func.func @_edca_kernel(%arg0: i32, %arg1: i32, %arg2: memref<1x1x128xf32, #tpu.memory_space<vmem>>, %arg3: memref<1x2x128xf32, #tpu.memory_space<vmem>>, %arg4: memref<1x2x128xf32, #tpu.memory_space<vmem>>) attributes {dimension_semantics = [#tpu.dimension_semantics<parallel>, #tpu.dimension_semantics<parallel>], iteration_bounds = array<i64: 2, 1>, scalar_prefetch = 0 : i64, scratch_operands = 0 : i64, tpu.core_type = #tpu.core_type<tc>, window_params = [{transform_indices = @transform_0, window_bounds = array<i64: 1, 1, 128>}, {transform_indices = @transform_1, window_bounds = array<i64: 1, 2, 128>}, {transform_indices = @transform_2, window_bounds = array<i64: 1, 2, 128>}]} {
    %c0 = arith.constant 0 : index
    %c0_0 = arith.constant 0 : index
    %c0_1 = arith.constant 0 : index
    %0 = vector.load %arg3[%c0, %c0_0, %c0_1] : memref<1x2x128xf32, #tpu.memory_space<vmem>>, vector<1x2x128xf32>
    %1 = vector.shape_cast %0 : vector<1x2x128xf32> to vector<2x128xf32>
    %c0_2 = arith.constant 0 : index
    %c0_3 = arith.constant 0 : index
    %c0_4 = arith.constant 0 : index
    %2 = vector.load %arg2[%c0_2, %c0_3, %c0_4] : memref<1x1x128xf32, #tpu.memory_space<vmem>>, vector<1x1x128xf32>
    %3 = vector.shape_cast %2 : vector<1x1x128xf32> to vector<1x128xf32>
    %4 = vector.broadcast %3 : vector<1x128xf32> to vector<2x128xf32>
    %5 = arith.mulf %1, %4 : vector<2x128xf32>
    %c0_5 = arith.constant 0 : index
    %c0_6 = arith.constant 0 : index
    %c0_7 = arith.constant 0 : index
    %6 = vector.load %arg4[%c0_5, %c0_6, %c0_7] : memref<1x2x128xf32, #tpu.memory_space<vmem>>, vector<1x2x128xf32>
    %7 = vector.shape_cast %6 : vector<1x2x128xf32> to vector<2x128xf32>
    %8 = vector.shape_cast %5 : vector<2x128xf32> to vector<1x2x128xf32>
    tpu.vector_store %arg4[%c0_5, %c0_6, %c0_7], %8 {strides = array<i32>} : memref<1x2x128xf32, #tpu.memory_space<vmem>>, vector<1x2x128xf32>,
    return
  }
  func.func @transform_0(%arg0: i32, %arg1: i32) -> (i32, i32, i32) {
    %c0_i32 = arith.constant 0 : i32
    %c0_i32_0 = arith.constant 0 : i32
    %c0_i32_1 = arith.constant 0 : i32
    return %arg0, %c0_i32, %c0_i32_0 : i32, i32, i32
  }
  func.func @transform_1(%arg0: i32, %arg1: i32) -> (i32, i32, i32) {
    %c0_i32 = arith.constant 0 : i32
    %c0_i32_0 = arith.constant 0 : i32
    return %arg0, %arg1, %c0_i32 : i32, i32, i32
  }
  func.func @transform_2(%arg0: i32, %arg1: i32) -> (i32, i32, i32) {
    %c0_i32 = arith.constant 0 : i32
    %c0_i32_0 = arith.constant 0 : i32
    return %arg0, %arg1, %c0_i32 : i32, i32, i32
  }
}

</mosaic_0001>

<llo_original>
// kernel: tpu_custom_call.1
$region0: #{tpu_custom_call.1}
  #allocation0 [shape = 'u32[]', space=smem, size = 0x4, offset = 0x4, fixed_abs, tag = 'smem constant byte address 0x4 - core index']
  #allocation1 [shape = 'u32[144,128]{1,0:T(1,128)}', space=vmem, size = 0x12000, scoped, tag = 'internal scratch']
  %s0 = inlined_call_operand.hbm [shape: f32[2,1,128], index: 0, kind: input, shape index: {}]
  %s1 = inlined_call_operand.hbm [shape: f32[2,2,128], index: 1, kind: input, shape index: {}]
  %s2 = inlined_call_operand.hbm [shape: f32[2,2,128], index: 2, kind: output, shape index: {}]
  %s3 = sld [smem:[#allocation0]]
  $region49: #{tpu_custom_call.1} parent=0
    _
  %s5 = ssub.s32 1, %s3
  %s6 = scalar_select 0, %s5, %s3
  $region1: #{tpu_custom_call.1} parent=0
    #allocation2 [shape = 'u8[1024]{0}', space=vmem, size = 0x400, scoped, tag = 'input window, operand 0']
    #allocation3 [shape = 's32[2]{0}', space=sflag, size = 0x8, scoped, tag = 'scoped memory for tpu_custom_call.1']
    #allocation4 [shape = 's32[2]{0}', space=sflag, size = 0x8, scoped, tag = 'scoped memory for tpu_custom_call.1']
    #allocation5 [shape = 'u8[2048]{0}', space=vmem, size = 0x800, scoped, tag = 'input window, operand 1']
    #allocation6 [shape = 's32[2]{0}', space=sflag, size = 0x8, scoped, tag = 'scoped memory for tpu_custom_call.1']
    #allocation7 [shape = 'u8[2048]{0}', space=vmem, size = 0x800, scoped, tag = 'output window, operand 0']
    %7 = vsyncpa [#allocation3], 0
    %s8 = scalar_lea.sflag [#allocation3], 1
    %9 = vsyncpa %s8, 0
    %10 = vsyncpa [#allocation6], 0
    %s11 = scalar_lea.sflag [#allocation6], 1
    %12 = vsyncpa %s11, 0
    %13 = vsyncpa [#allocation4], 0
    %s14 = scalar_lea.sflag [#allocation4], 1
    %15 = vsyncpa %s14, 0
    loop: start=0, step=1, limit=4
    $region2: #{tpu_custom_call.1} parent=1 // loop_pre_header
      _
    $region3: #{tpu_custom_call.1} parent=1 // loop_header
      %s17 = sphi 0, %s21
      %p18 = scmp.ge.s32.totalorder %s17, 4
      %s24 = sphi 0, %s36
      %s25 = sphi 0, %s32
      %s26 = sphi 0, %s24
      %s27 = sphi 0, %s25
      %s28 = sphi 0, %s26
      %s29 = sphi 0, %s27
      %s39 = sphi 0, %s41
      %s42 = sphi 0, %s39
      %s43 = sphi 0, %s42
      %s59 = sphi 0, %s43
      %s67 = sphi 0, %s69
      %s70 = sphi 0, %s67
      %s71 = sphi 0, %s70
      %s87 = sphi 0, %s71
      %s95 = sphi 0, %s97
      %s98 = sphi 0, %s95
      %s99 = sphi 0, %s98
      %s115 = sphi 0, %s99
    $region4: #{tpu_custom_call.1} parent=1 // loop_header_branch
      %20 = sbr.rel (%p18) target = $region8
    $region5: #{tpu_custom_call.1} parent=1 // loop_body
      %s22 = ssub.s32 %s17, 1
      %s23 = ssub.s32 %s17, 2
      %s30 = sadd.s32 1, %s25
      %p31 = scmp.ge.s32.totalorder %s30, 1
      %s32 = scalar_select %p31, 0, %s30
      %s33 = sadd.s32 1, %s24
      %s34 = scalar_select %p31, %s33, %s24
      %p35 = scmp.ge.s32.totalorder %s34, 2
      %s36 = scalar_select %p35, 0, %s34
      %s37 = ssub.s32 %s24, %s36
      %p38 = scmp.eq.s32.totalorder %s37, 0
      %s40 = sadd.s32 %s39, 1
      %s41 = scalar_select %p38, %s39, %s40
      %p44 = pneg %p38
      %p45 = scmp.eq.s32.totalorder %s17, 1
      %p46 = por %p44, %p45
      %p47 = scmp.ne.s32.totalorder %s39, %s42
      %p48 = scmp.eq.s32.totalorder %s17, 0
      %p49 = por %p47, %p48
      %p50 = scmp.ne.s32.totalorder %s39, %s42
      %p51 = scmp.eq.s32.totalorder %s22, 1
      %p52 = por %p50, %p51
      %p53 = scmp.ne.s32.totalorder %s42, %s43
      %p54 = scmp.eq.s32.totalorder %s22, 0
      %p55 = por %p53, %p54
      %p56 = scmp.ne.s32.totalorder %s42, %s43
      %p57 = scmp.eq.s32.totalorder %s23, 1
      %p58 = por %p56, %p57
      %p60 = scmp.ne.s32.totalorder %s43, %s59
      %p61 = scmp.eq.s32.totalorder %s23, 0
      %p62 = por %p60, %p61
      %s63 = ssub.s32 %s24, %s36
      %s64 = ssub.s32 %s25, %s32
      %s65 = sor.u32 %s63, %s64
      %p66 = scmp.eq.s32.totalorder %s65, 0
      %s68 = sadd.s32 %s67, 1
      %s69 = scalar_select %p66, %s67, %s68
      %p72 = pneg %p66
      %p73 = scmp.eq.s32.totalorder %s17, 1
      %p74 = por %p72, %p73
      %p75 = scmp.ne.s32.totalorder %s67, %s70
      %p76 = scmp.eq.s32.totalorder %s17, 0
      %p77 = por %p75, %p76
      %p78 = scmp.ne.s32.totalorder %s67, %s70
      %p79 = scmp.eq.s32.totalorder %s22, 1
      %p80 = por %p78, %p79
      %p81 = scmp.ne.s32.totalorder %s70, %s71
      %p82 = scmp.eq.s32.totalorder %s22, 0
      %p83 = por %p81, %p82
      %p84 = scmp.ne.s32.totalorder %s70, %s71
      %p85 = scmp.eq.s32.totalorder %s23, 1
      %p86 = por %p84, %p85
      %p88 = scmp.ne.s32.totalorder %s71, %s87
      %p89 = scmp.eq.s32.totalorder %s23, 0
      %p90 = por %p88, %p89
      %s91 = ssub.s32 %s24, %s36
      %s92 = ssub.s32 %s25, %s32
      %s93 = sor.u32 %s91, %s92
      %p94 = scmp.eq.s32.totalorder %s93, 0
      %s96 = sadd.s32 %s95, 1
      %s97 = scalar_select %p94, %s95, %s96
      %p100 = pneg %p94
      %p101 = scmp.eq.s32.totalorder %s17, 1
      %p102 = por %p100, %p101
      %p103 = scmp.ne.s32.totalorder %s95, %s98
      %p104 = scmp.eq.s32.totalorder %s17, 0
      %p105 = por %p103, %p104
      %p106 = scmp.ne.s32.totalorder %s95, %s98
      %p107 = scmp.eq.s32.totalorder %s22, 1
      %p108 = por %p106, %p107
      %p109 = scmp.ne.s32.totalorder %s98, %s99
      %p110 = scmp.eq.s32.totalorder %s22, 0
      %p111 = por %p109, %p110
      %p112 = scmp.ne.s32.totalorder %s98, %s99
      %p113 = scmp.eq.s32.totalorder %s23, 1
      %p114 = por %p112, %p113
      %p116 = scmp.ne.s32.totalorder %s99, %s115
      %p117 = scmp.eq.s32.totalorder %s23, 0
      %p118 = por %p116, %p117
      %p119 = scmp.le.s32.totalorder 1, %s17
      %p120 = scmp.lt.s32.totalorder %s17, 3
      %p121 = pnand %p119, %p120
      %p122 = pneg %p121
      // Predicated region
      $region9: #{tpu_custom_call.1} parent=5 // pred_check
        _
      $region10: #{tpu_custom_call.1} parent=5 // pred_check_branch
        %124 = sbr.rel (%p121) target = $region12
      $region11: #{tpu_custom_call.1} parent=5 // pred_region
        %s125 = ssub.s32 %s17, 1
      $region12: #{tpu_custom_call.1} parent=5 // pred_fallthru
        _
      %p126 = scmp.lt.s32.totalorder %s17, 2
      // Predicated region
      $region13: #{tpu_custom_call.1} parent=5 // pred_check
        %p127 = pneg %p126
      $region14: #{tpu_custom_call.1} parent=5 // pred_check_branch
        %129 = sbr.rel (%p127) target = $region16
      $region15: #{tpu_custom_call.1} parent=5 // pred_region
        // Predicated region
        $region17: #{tpu_custom_call.1} parent=15 // pred_check
          %p130 = pneg %p49
        $region18: #{tpu_custom_call.1} parent=15 // pred_check_branch
          %132 = sbr.rel (%p130) target = $region20
        $region19: #{tpu_custom_call.1} parent=15 // pred_region
          %s133 = sand.u32 %s39, 1
          %s134 = scalar_lea.sflag [#allocation3], %s133
          %s135 = sand.u32 %s39, 1
          %s136 = scalar_lea.vmem [#allocation2], %s135
          %s138 = ssub.s32 16, 16
          %139 = vsyncadd %s134, %s138
          %s140 = smul.addr %s24, 16
          %s141 = scalar_lea.hbm %s0, %s140
          %s143 = sshll.u32 %s136, 4
          %s144 = int_to_ptr.vmem [resolvable:$true] %s143
          %146 = dma.hbm_to_vmem [thread:$0]  %s141, 16, %s144, %s134
        $region20: #{tpu_custom_call.1} parent=15 // pred_fallthru
          _
        // Predicated region
        $region21: #{tpu_custom_call.1} parent=15 // pred_check
          %p147 = pneg %p77
        $region22: #{tpu_custom_call.1} parent=15 // pred_check_branch
          %149 = sbr.rel (%p147) target = $region24
        $region23: #{tpu_custom_call.1} parent=15 // pred_region
          %s150 = sand.u32 %s67, 1
          %s151 = scalar_lea.sflag [#allocation6], %s150
          %s152 = sand.u32 %s67, 1
          %s153 = smul.addr %s152, 2
          %s154 = scalar_lea.vmem [#allocation5], %s153
          %s156 = ssub.s32 32, 32
          %157 = vsyncadd %s151, %s156
          %s158 = sadd.s32 %s25, %s24
          %s159 = smul.addr %s158, 32
          %s160 = scalar_lea.hbm %s1, %s159
          %s162 = sshll.u32 %s154, 4
          %s163 = int_to_ptr.vmem [resolvable:$true] %s162
          %165 = dma.hbm_to_vmem [thread:$0]  %s160, 32, %s163, %s151
        $region24: #{tpu_custom_call.1} parent=15 // pred_fallthru
          _
      $region16: #{tpu_custom_call.1} parent=5 // pred_fallthru
        _
      %p166 = scmp.le.s32.totalorder 1, %s17
      %p167 = scmp.lt.s32.totalorder %s17, 3
      %p168 = pnand %p166, %p167
      %p169 = pneg %p168
      // Predicated region
      $region25: #{tpu_custom_call.1} parent=5 // pred_check
        _
      $region26: #{tpu_custom_call.1} parent=5 // pred_check_branch
        %171 = sbr.rel (%p168) target = $region28
      $region27: #{tpu_custom_call.1} parent=5 // pred_region
        %s172 = ssub.s32 %s17, 1
        %s173 = sand.u32 %s42, 1
        %s174 = scalar_lea.sflag [#allocation3], %s173
        %s175 = sand.u32 %s42, 1
        %s176 = scalar_lea.vmem [#allocation2], %s175
        // Predicated region
        $region29: #{tpu_custom_call.1} parent=27 // pred_check
          %p177 = pneg %p55
        $region30: #{tpu_custom_call.1} parent=27 // pred_check_branch
          %179 = sbr.rel (%p177) target = $region32
        $region31: #{tpu_custom_call.1} parent=27 // pred_region
          %180 = dma.done %s174, 16
        $region32: #{tpu_custom_call.1} parent=27 // pred_fallthru
          _
        %s181 = sand.u32 %s70, 1
        %s182 = scalar_lea.sflag [#allocation6], %s181
        %s183 = sand.u32 %s70, 1
        %s184 = smul.addr %s183, 2
        %s185 = scalar_lea.vmem [#allocation5], %s184
        // Predicated region
        $region33: #{tpu_custom_call.1} parent=27 // pred_check
          %p186 = pneg %p83
        $region34: #{tpu_custom_call.1} parent=27 // pred_check_branch
          %188 = sbr.rel (%p186) target = $region36
        $region35: #{tpu_custom_call.1} parent=27 // pred_region
          %189 = dma.done %s182, 32
        $region36: #{tpu_custom_call.1} parent=27 // pred_fallthru
          _
        %s190 = sand.u32 %s42, 1
        %s191 = scalar_lea.sflag [#allocation3], %s190
        %s192 = sand.u32 %s42, 1
        %s193 = scalar_lea.vmem [#allocation2], %s192
        %p194 = pneg %p55
        %p195 = pneg %p52
        %s196 = sand.u32 %s70, 1
        %s197 = scalar_lea.sflag [#allocation6], %s196
        %s198 = sand.u32 %s70, 1
        %s199 = smul.addr %s198, 2
        %s200 = scalar_lea.vmem [#allocation5], %s199
        %p201 = pneg %p83
        %p202 = pneg %p80
        %p203 = pneg %p111
        %p204 = pneg %p108
        %s205 = sand.u32 %s98, 1
        %s206 = scalar_lea.sflag [#allocation4], %s205
        %s207 = sand.u32 %s98, 1
        %s208 = smul.addr %s207, 2
        %s209 = scalar_lea.vmem [#allocation7], %s208
        %v210 = vld [vmem:[%s185] sm:$0x3]
        %v211 = vld [vmem:[%s176] sm:$0x1]
        %v213 = vlaneseq
        %v214 = vshrl.u32 %v213, 7
        %v215 = vsub.s32 0, %v214
        %v216 = vrot.slane %v211, %v215
        %v218 = vmul.f32 %v210, %v216
        %219 = vst [vmem:[%s209] sm:$0x3] %v218
        %s220 = sand.u32 %s98, 1
        %s221 = scalar_lea.sflag [#allocation4], %s220
        %s222 = sand.u32 %s98, 1
        %s223 = smul.addr %s222, 2
        %s224 = scalar_lea.vmem [#allocation7], %s223
        // Predicated region
        $region37: #{tpu_custom_call.1} parent=27 // pred_check
          %p225 = pneg %p108
        $region38: #{tpu_custom_call.1} parent=27 // pred_check_branch
          %227 = sbr.rel (%p225) target = $region40
        $region39: #{tpu_custom_call.1} parent=27 // pred_region
          %s229 = ssub.s32 32, 32
          %230 = vsyncadd %s221, %s229
          %s231 = sadd.s32 %s27, %s26
          %s232 = smul.addr %s231, 32
          %s233 = scalar_lea.hbm %s2, %s232
          %s235 = sshll.u32 %s224, 4
          %s236 = int_to_ptr.vmem [resolvable:$true] %s235
          %238 = dma.vmem_to_hbm [thread:$0]  %s236, 32, %s233, %s221
        $region40: #{tpu_custom_call.1} parent=27 // pred_fallthru
          _
      $region28: #{tpu_custom_call.1} parent=5 // pred_fallthru
        _
      %p239 = scmp.le.s32.totalorder 2, %s17
      // Predicated region
      $region41: #{tpu_custom_call.1} parent=5 // pred_check
        %p240 = pneg %p239
      $region42: #{tpu_custom_call.1} parent=5 // pred_check_branch
        %242 = sbr.rel (%p240) target = $region44
      $region43: #{tpu_custom_call.1} parent=5 // pred_region
        %s243 = ssub.s32 %s17, 2
        // Predicated region
        $region45: #{tpu_custom_call.1} parent=43 // pred_check
          %p244 = pneg %p114
        $region46: #{tpu_custom_call.1} parent=43 // pred_check_branch
          %246 = sbr.rel (%p244) target = $region48
        $region47: #{tpu_custom_call.1} parent=43 // pred_region
          %s247 = sand.u32 %s99, 1
          %s248 = scalar_lea.sflag [#allocation4], %s247
          %s249 = sand.u32 %s99, 1
          %s250 = smul.addr %s249, 2
          %s251 = scalar_lea.vmem [#allocation7], %s250
          %252 = dma.done %s248, 32
        $region48: #{tpu_custom_call.1} parent=43 // pred_fallthru
          _
      $region44: #{tpu_custom_call.1} parent=5 // pred_fallthru
        _
    $region6: #{tpu_custom_call.1} parent=1 // loop_footer
      %s21 = sadd.s32 1, %s17
    $region7: #{tpu_custom_call.1} parent=1 // loop_footer_branch
      %16 = sbr.rel target = $region3
    $region8: #{tpu_custom_call.1} parent=1 // loop_exit
      _
    %253 = vsyncpa [#allocation3], 1
    %s254 = scalar_lea.sflag [#allocation3], 1
    %255 = vsyncpa %s254, 1
    %256 = vsyncpa [#allocation6], 1
    %s257 = scalar_lea.sflag [#allocation6], 1
    %258 = vsyncpa %s257, 1
    %259 = vsyncpa [#allocation4], 1
    %s260 = scalar_lea.sflag [#allocation4], 1
    %261 = vsyncpa %s260, 1

</llo_original>
